<compile_context>
chip_gen: v7x
topology: tpu7x:2x2x1
jax: 0.10.0
libtpu: 0.0.40
codegen_flags: <defaults>
</compile_context>

<pallas_src>
import math

import jax
import jax.numpy as jnp
import numpy as np
from jax.experimental import pallas as pl
from jax.experimental.pallas import tpu as pltpu


def _choose_bt(B, C):
    """Images per grid step: aim for Bt*C >= 8 (all 8 vreg sublanes filled)
    while keeping at least 2 parallel grid steps (v7x has 2 TensorCores)."""
    bt = 1
    for cand in range(1, B + 1):
        if B % cand:
            continue
        if B >= 2 and B // cand < 2:
            break
        bt = cand
        if cand * C >= 8:
            break
    return bt


def _make_cbam_kernel(C, H, W, Bt):
    HW = H * W

    def cbam_kernel(x_ref, w1_ref, w2_ref, wsp_ref, o_ref):
        # x_ref:   (1, Bt*C, HW)  VMEM  (Bt flattened NCHW images stacked on sublanes)
        # w1_ref:  (C, Cr)        VMEM  (1x1 conv #1, stored (in, out))
        # w2_ref:  (C, Cr)        VMEM  (1x1 conv #2, stored (out, in))
        # wsp_ref: (18,)          SMEM  (3x3 conv weights, index c*9 + ky*3 + kx)
        # o_ref:   (1, Bt*C, HW)  VMEM
        x = x_ref[0].astype(jnp.float32)                       # (Bt*C, HW)
        w1 = w1_ref[...]                                       # (C, Cr)
        w2 = w2_ref[...]                                       # (C, Cr)

        # ---------------- channel attention ----------------
        mx = jnp.max(x, axis=1, keepdims=True)                 # (Bt*C, 1) global max pool
        av = jnp.mean(x, axis=1, keepdims=True)                # (Bt*C, 1) global avg pool

        # Shared MLP on the VPU, unrolled over the Bt images (C=4, Cr=2 is far
        # below one MXU tile).
        ca_parts = []
        for b in range(Bt):
            lo = b * C
            mx_b = mx[lo:lo + C]                               # (C, 1)
            av_b = av[lo:lo + C]                               # (C, 1)
            h_mx = jnp.maximum(jnp.sum(w1 * mx_b, axis=0, keepdims=True), 0.0)  # (1, Cr)
            h_av = jnp.maximum(jnp.sum(w1 * av_b, axis=0, keepdims=True), 0.0)  # (1, Cr)
            fc = (jnp.sum(w2 * h_mx, axis=1, keepdims=True)
                  + jnp.sum(w2 * h_av, axis=1, keepdims=True))                  # (C, 1)
            ca_parts.append(jax.nn.sigmoid(fc))
        ca = ca_parts[0] if Bt == 1 else jnp.concatenate(ca_parts, axis=0)      # (Bt*C, 1)
        x1 = x * ca                                            # (Bt*C, HW)

        # ---------------- spatial attention ----------------
        # Per-image channel max / mean, stacked [max_0..max_{Bt-1}, mean_0..mean_{Bt-1}].
        maxs = [jnp.max(x1[b * C:(b + 1) * C], axis=0, keepdims=True) for b in range(Bt)]
        means = [jnp.mean(x1[b * C:(b + 1) * C], axis=0, keepdims=True) for b in range(Bt)]
        maps = jnp.concatenate(maxs + means, axis=0)           # (2*Bt, HW)

        # Edge masks in flattened-HW coordinates (evaluated at output positions).
        pos = jax.lax.broadcasted_iota(jnp.int32, (1, HW), 1)
        col = pos % W
        not_first_col = col > 0
        not_last_col = col < (W - 1)
        not_first_row = pos >= W
        not_last_row = pos < (H - 1) * W

        # 3x3 "same" cross-correlation, fully in registers.
        # dx shifts: one lane roll per dx=+-1, column-masked once per group
        # (the column of an output position is preserved by whole-row shifts,
        # so the mask can be applied before the dy roll).
        colmaps = []
        for dx in (-1, 0, 1):
            m = maps if dx == 0 else pltpu.roll(maps, shift=(-dx) % HW, axis=1)
            if dx == -1:
                m = jnp.where(not_first_col, m, 0.0)
            elif dx == 1:
                m = jnp.where(not_last_col, m, 0.0)
            colmaps.append(m)                                  # each (2*Bt, HW)

        # dy groups: weight-combine the 3 taps of a row (max & mean channels),
        # then one lane roll by +-W and one row mask per non-center group.
        acc = jnp.zeros((Bt, HW), jnp.float32)
        for ky, dy in enumerate((-1, 0, 1)):
            part = jnp.zeros((Bt, HW), jnp.float32)
            for kx in range(3):
                k = ky * 3 + kx
                cm = colmaps[kx]
                part = (part
                        + wsp_ref[k] * cm[0:Bt]                # max-channel taps
                        + wsp_ref[9 + k] * cm[Bt:2 * Bt])      # mean-channel taps
            if dy != 0:
                part = pltpu.roll(part, shift=(-dy * W) % HW, axis=1)
                mask = not_first_row if dy == -1 else not_last_row
                part = jnp.where(mask, part, 0.0)
            acc = acc + part
        sa = jax.nn.sigmoid(acc)                               # (Bt, HW)

        outs = [x1[b * C:(b + 1) * C] * sa[b:b + 1] for b in range(Bt)]
        out = outs[0] if Bt == 1 else jnp.concatenate(outs, axis=0)
        o_ref[0] = out.astype(o_ref.dtype)                     # one lane-dense full-tile store

    return cbam_kernel


def cbam_forward(x_nchw, w1_oi, w2_oi, wsp, *, bt=None):
    """x_nchw: (B, C, H, W); w1_oi: (Cr, C); w2_oi: (C, Cr); wsp: (2, 3, 3)."""
    B, C, H, W = x_nchw.shape
    Cr = w1_oi.shape[0]
    HW = H * W

    if bt is None:
        bt = _choose_bt(B, C)
    assert B % bt == 0
    G = B // bt

    x = x_nchw.reshape(G, bt * C, HW)                   # free reshape of contiguous NCHW
    w1_io = jnp.transpose(w1_oi).astype(jnp.float32)    # (C, Cr)  (in, out)
    w2 = w2_oi.astype(jnp.float32)                      # (C, Cr)  (out, in)
    wsp_flat = wsp.reshape(-1).astype(jnp.float32)      # (18,) -> 1-D SMEM (~128 B, not [8,128]-padded)

    kernel = _make_cbam_kernel(C, H, W, bt)
    out = pl.pallas_call(
        kernel,
        out_shape=jax.ShapeDtypeStruct((G, bt * C, HW), x.dtype),
        grid_spec=pltpu.PrefetchScalarGridSpec(
            num_scalar_prefetch=0,
            grid=(G,),
            in_specs=[
                pl.BlockSpec((1, bt * C, HW), lambda b: (b, 0, 0)),
                pl.BlockSpec((C, Cr), lambda b: (0, 0)),
                pl.BlockSpec((C, Cr), lambda b: (0, 0)),
                pl.BlockSpec(memory_space=pltpu.MemorySpace.SMEM),
            ],
            out_specs=pl.BlockSpec((1, bt * C, HW), lambda b: (b, 0, 0)),
        ),
        compiler_params=pltpu.CompilerParams(
            # Batch axis is independent -> megacore / 2-TC sharding on v7x.
            # For production C/H/W also set vmem_limit_bytes here and tile HW
            # with an extra "arbitrary" axis (v5e default scoped VMEM 16 MiB,
            # v6e/v7x 32 MiB, v7x physical 64 MiB).
            dimension_semantics=("parallel",),
        ),
    )(x, w1_io, w2, wsp_flat)
    return out.reshape(B, C, H, W)


def cbam_reference(x_nchw, w1_oi, w2_oi, wsp):
    """Pure-JAX reference matching the PyTorch CBAM forward (NCHW)."""
    mx = jnp.max(x_nchw, axis=(2, 3), keepdims=True)
    av = jnp.mean(x_nchw, axis=(2, 3), keepdims=True)

    def fc(v):  # v: (B, C, 1, 1)
        vv = v[:, :, 0, 0]
        h = jnp.maximum(vv @ w1_oi.T, 0.0)
        return h @ w2_oi.T

    ca = jax.nn.sigmoid(fc(mx) + fc(av))[:, :, None, None]
    x1 = x_nchw * ca
    cmax = jnp.max(x1, axis=1, keepdims=True)
    cmean = jnp.mean(x1, axis=1, keepdims=True)
    cat = jnp.concatenate([cmax, cmean], axis=1)        # (B, 2, H, W)
    sa = jax.lax.conv_general_dilated(
        cat, wsp[None],                                 # (1, 2, 3, 3)
        window_strides=(1, 1), padding="SAME",
        dimension_numbers=("NCHW", "OIHW", "NCHW"))
    sa = jax.nn.sigmoid(sa)
    return x1 * sa


if __name__ == "__main__":
    # B=4 so that Bt=2 images pack per grid step (8 full sublanes) while the
    # parallel batch grid still has 2 steps for v7x's second TensorCore.
    B, C, H, W = 4, 4, 16, 16
    reduction = 2
    Cr = C // reduction

    key = jax.random.PRNGKey(0)
    k1, k2, k3, kx = jax.random.split(key, 4)

    # Deterministic kaiming_normal (fan_in, relu) style init, no bias (as in module).
    w1_oi = jax.random.normal(k1, (Cr, C), jnp.float32) * math.sqrt(2.0 / C)
    w2_oi = jax.random.normal(k2, (C, Cr), jnp.float32) * math.sqrt(2.0 / Cr)
    wsp = jax.random.normal(k3, (2, 3, 3), jnp.float32) * math.sqrt(2.0 / (2 * 3 * 3))
    x = jax.random.normal(kx, (B, C, H, W), jnp.float32)

    out = jax.block_until_ready(cbam_forward(x, w1_oi, w2_oi, wsp))
    ref = jax.block_until_ready(cbam_reference(x, w1_oi, w2_oi, wsp))
    np.testing.assert_allclose(np.asarray(out), np.asarray(ref), rtol=2e-3, atol=1e-4)

    print("KERNEL_OK")
</pallas_src>

<mosaic_0001>
module attributes {stable_mosaic.version = 11 : i64} {
  func.func @cbam_kernel(%arg0: i32, %arg1: memref<1x8x256xf32, #tpu.memory_space<vmem>>, %arg2: memref<4x2xf32, #tpu.memory_space<vmem>>, %arg3: memref<4x2xf32, #tpu.memory_space<vmem>>, %arg4: memref<18xf32, #tpu.memory_space<smem>>, %arg5: memref<1x8x256xf32, #tpu.memory_space<vmem>>) attributes {dimension_semantics = [#tpu.dimension_semantics<parallel>], iteration_bounds = array<i64: 2>, scalar_prefetch = 0 : i64, scratch_operands = 0 : i64, tpu.core_type = #tpu.core_type<tc>, window_params = [{transform_indices = @transform_0, window_bounds = array<i64: 1, 8, 256>}, {pipeline_mode = #tpu.pipeline_mode<synchronous>, transform_indices = @transform_1, window_bounds = array<i64: 4, 2>}, {pipeline_mode = #tpu.pipeline_mode<synchronous>, transform_indices = @transform_2, window_bounds = array<i64: 4, 2>}, {transform_indices = @transform_3, window_bounds = array<i64: 18>}, {transform_indices = @transform_4, window_bounds = array<i64: 1, 8, 256>}]} {
    %c0 = arith.constant 0 : index
    %c0_0 = arith.constant 0 : index
    %c0_1 = arith.constant 0 : index
    %0 = vector.load %arg1[%c0, %c0_0, %c0_1] : memref<1x8x256xf32, #tpu.memory_space<vmem>>, vector<1x8x256xf32>
    %1 = vector.shape_cast %0 : vector<1x8x256xf32> to vector<8x256xf32>
    %c0_2 = arith.constant 0 : index
    %c0_3 = arith.constant 0 : index
    %2 = vector.load %arg2[%c0_2, %c0_3] : memref<4x2xf32, #tpu.memory_space<vmem>>, vector<4x2xf32>
    %c0_4 = arith.constant 0 : index
    %c0_5 = arith.constant 0 : index
    %3 = vector.load %arg3[%c0_4, %c0_5] : memref<4x2xf32, #tpu.memory_space<vmem>>, vector<4x2xf32>
    %cst = arith.constant dense<0xFF800000> : vector<8xf32>
    %4 = vector.multi_reduction <maximumf>, %1, %cst [1] : vector<8x256xf32> to vector<8xf32>
    %5 = vector.shape_cast %4 : vector<8xf32> to vector<8x1xf32>
    %cst_6 = arith.constant dense<0.000000e+00> : vector<8xf32>
    %6 = vector.multi_reduction <add>, %1, %cst_6 [1] : vector<8x256xf32> to vector<8xf32>
    %7 = vector.shape_cast %6 : vector<8xf32> to vector<8x1xf32>
    %cst_7 = arith.constant 2.560000e+02 : f32
    %8 = vector.broadcast %cst_7 : f32 to vector<8x1xf32>
    %9 = arith.divf %7, %8 : vector<8x1xf32>
    %10 = vector.extract_strided_slice %5 {offsets = [0, 0], sizes = [4, 1], strides = [1, 1]} : vector<8x1xf32> to vector<4x1xf32>
    %11 = vector.extract_strided_slice %9 {offsets = [0, 0], sizes = [4, 1], strides = [1, 1]} : vector<8x1xf32> to vector<4x1xf32>
    %12 = vector.broadcast %10 : vector<4x1xf32> to vector<4x2xf32>
    %13 = arith.mulf %2, %12 : vector<4x2xf32>
    %cst_8 = arith.constant dense<0.000000e+00> : vector<2xf32>
    %14 = vector.multi_reduction <add>, %13, %cst_8 [0] : vector<4x2xf32> to vector<2xf32>
    %15 = vector.shape_cast %14 : vector<2xf32> to vector<1x2xf32>
    %cst_9 = arith.constant 0.000000e+00 : f32
    %16 = vector.broadcast %cst_9 : f32 to vector<1x2xf32>
    %17 = arith.maximumf %15, %16 : vector<1x2xf32>
    %18 = vector.broadcast %11 : vector<4x1xf32> to vector<4x2xf32>
    %19 = arith.mulf %2, %18 : vector<4x2xf32>
    %cst_10 = arith.constant dense<0.000000e+00> : vector<2xf32>
    %20 = vector.multi_reduction <add>, %19, %cst_10 [0] : vector<4x2xf32> to vector<2xf32>
    %21 = vector.shape_cast %20 : vector<2xf32> to vector<1x2xf32>
    %cst_11 = arith.constant 0.000000e+00 : f32
    %22 = vector.broadcast %cst_11 : f32 to vector<1x2xf32>
    %23 = arith.maximumf %21, %22 : vector<1x2xf32>
    %24 = vector.broadcast %17 : vector<1x2xf32> to vector<4x2xf32>
    %25 = arith.mulf %3, %24 : vector<4x2xf32>
    %cst_12 = arith.constant dense<0.000000e+00> : vector<4xf32>
    %26 = vector.multi_reduction <add>, %25, %cst_12 [1] : vector<4x2xf32> to vector<4xf32>
    %27 = vector.shape_cast %26 : vector<4xf32> to vector<4x1xf32>
    %28 = vector.broadcast %23 : vector<1x2xf32> to vector<4x2xf32>
    %29 = arith.mulf %3, %28 : vector<4x2xf32>
    %cst_13 = arith.constant dense<0.000000e+00> : vector<4xf32>
    %30 = vector.multi_reduction <add>, %29, %cst_13 [1] : vector<4x2xf32> to vector<4xf32>
    %31 = vector.shape_cast %30 : vector<4xf32> to vector<4x1xf32>
    %32 = arith.addf %27, %31 : vector<4x1xf32>
    %33 = arith.negf %32 : vector<4x1xf32>
    %34 = math.exp %33 : vector<4x1xf32>
    %cst_14 = arith.constant 1.000000e+00 : f32
    %35 = vector.broadcast %cst_14 : f32 to vector<4x1xf32>
    %36 = arith.addf %35, %34 : vector<4x1xf32>
    %37 = arith.divf %35, %36 : vector<4x1xf32>
    %38 = vector.extract_strided_slice %5 {offsets = [4, 0], sizes = [4, 1], strides = [1, 1]} : vector<8x1xf32> to vector<4x1xf32>
    %39 = vector.extract_strided_slice %9 {offsets = [4, 0], sizes = [4, 1], strides = [1, 1]} : vector<8x1xf32> to vector<4x1xf32>
    %40 = vector.broadcast %38 : vector<4x1xf32> to vector<4x2xf32>
    %41 = arith.mulf %2, %40 : vector<4x2xf32>
    %cst_15 = arith.constant dense<0.000000e+00> : vector<2xf32>
    %42 = vector.multi_reduction <add>, %41, %cst_15 [0] : vector<4x2xf32> to vector<2xf32>
    %43 = vector.shape_cast %42 : vector<2xf32> to vector<1x2xf32>
    %cst_16 = arith.constant 0.000000e+00 : f32
    %44 = vector.broadcast %cst_16 : f32 to vector<1x2xf32>
    %45 = arith.maximumf %43, %44 : vector<1x2xf32>
    %46 = vector.broadcast %39 : vector<4x1xf32> to vector<4x2xf32>
    %47 = arith.mulf %2, %46 : vector<4x2xf32>
    %cst_17 = arith.constant dense<0.000000e+00> : vector<2xf32>
    %48 = vector.multi_reduction <add>, %47, %cst_17 [0] : vector<4x2xf32> to vector<2xf32>
    %49 = vector.shape_cast %48 : vector<2xf32> to vector<1x2xf32>
    %cst_18 = arith.constant 0.000000e+00 : f32
    %50 = vector.broadcast %cst_18 : f32 to vector<1x2xf32>
    %51 = arith.maximumf %49, %50 : vector<1x2xf32>
    %52 = vector.broadcast %45 : vector<1x2xf32> to vector<4x2xf32>
    %53 = arith.mulf %3, %52 : vector<4x2xf32>
    %cst_19 = arith.constant dense<0.000000e+00> : vector<4xf32>
    %54 = vector.multi_reduction <add>, %53, %cst_19 [1] : vector<4x2xf32> to vector<4xf32>
    %55 = vector.shape_cast %54 : vector<4xf32> to vector<4x1xf32>
    %56 = vector.broadcast %51 : vector<1x2xf32> to vector<4x2xf32>
    %57 = arith.mulf %3, %56 : vector<4x2xf32>
    %cst_20 = arith.constant dense<0.000000e+00> : vector<4xf32>
    %58 = vector.multi_reduction <add>, %57, %cst_20 [1] : vector<4x2xf32> to vector<4xf32>
    %59 = vector.shape_cast %58 : vector<4xf32> to vector<4x1xf32>
    %60 = arith.addf %55, %59 : vector<4x1xf32>
    %61 = arith.negf %60 : vector<4x1xf32>
    %62 = math.exp %61 : vector<4x1xf32>
    %cst_21 = arith.constant 1.000000e+00 : f32
    %63 = vector.broadcast %cst_21 : f32 to vector<4x1xf32>
    %64 = arith.addf %63, %62 : vector<4x1xf32>
    %65 = arith.divf %63, %64 : vector<4x1xf32>
    %66 = tpu.concatenate %37, %65 in 0 : vector<4x1xf32>, vector<4x1xf32> -> vector<8x1xf32>
    %67 = vector.broadcast %66 : vector<8x1xf32> to vector<8x256xf32>
    %68 = arith.mulf %1, %67 : vector<8x256xf32>
    %69 = vector.extract_strided_slice %68 {offsets = [0, 0], sizes = [4, 256], strides = [1, 1]} : vector<8x256xf32> to vector<4x256xf32>
    %cst_22 = arith.constant dense<0xFF800000> : vector<256xf32>
    %70 = vector.multi_reduction <maximumf>, %69, %cst_22 [0] : vector<4x256xf32> to vector<256xf32>
    %71 = vector.shape_cast %70 : vector<256xf32> to vector<1x256xf32>
    %72 = vector.extract_strided_slice %68 {offsets = [4, 0], sizes = [4, 256], strides = [1, 1]} : vector<8x256xf32> to vector<4x256xf32>
    %cst_23 = arith.constant dense<0xFF800000> : vector<256xf32>
    %73 = vector.multi_reduction <maximumf>, %72, %cst_23 [0] : vector<4x256xf32> to vector<256xf32>
    %74 = vector.shape_cast %73 : vector<256xf32> to vector<1x256xf32>
    %75 = vector.extract_strided_slice %68 {offsets = [0, 0], sizes = [4, 256], strides = [1, 1]} : vector<8x256xf32> to vector<4x256xf32>
    %cst_24 = arith.constant dense<0.000000e+00> : vector<256xf32>
    %76 = vector.multi_reduction <add>, %75, %cst_24 [0] : vector<4x256xf32> to vector<256xf32>
    %77 = vector.shape_cast %76 : vector<256xf32> to vector<1x256xf32>
    %cst_25 = arith.constant 4.000000e+00 : f32
    %78 = vector.broadcast %cst_25 : f32 to vector<1x256xf32>
    %79 = arith.divf %77, %78 : vector<1x256xf32>
    %80 = vector.extract_strided_slice %68 {offsets = [4, 0], sizes = [4, 256], strides = [1, 1]} : vector<8x256xf32> to vector<4x256xf32>
    %cst_26 = arith.constant dense<0.000000e+00> : vector<256xf32>
    %81 = vector.multi_reduction <add>, %80, %cst_26 [0] : vector<4x256xf32> to vector<256xf32>
    %82 = vector.shape_cast %81 : vector<256xf32> to vector<1x256xf32>
    %cst_27 = arith.constant 4.000000e+00 : f32
    %83 = vector.broadcast %cst_27 : f32 to vector<1x256xf32>
    %84 = arith.divf %82, %83 : vector<1x256xf32>
    %85 = tpu.concatenate %71, %74, %79, %84 in 0 : vector<1x256xf32>, vector<1x256xf32>, vector<1x256xf32>, vector<1x256xf32> -> vector<4x256xf32>
    %86 = tpu.iota {dimensions = array<i32: 1>} : vector<1x256xi32>
    %c16_i32 = arith.constant 16 : i32
    %c0_i32 = arith.constant 0 : i32
    %87 = arith.cmpi eq, %c16_i32, %c0_i32 : i32
    %c1_i32 = arith.constant 1 : i32
    %88 = arith.select %87, %c1_i32, %c16_i32 : i32
    %89 = vector.broadcast %88 : i32 to vector<1x256xi32>
    %90 = arith.remsi %86, %89 : vector<1x256xi32>
    %c0_i32_28 = arith.constant 0 : i32
    %91 = vector.broadcast %c0_i32_28 : i32 to vector<1x256xi32>
    %92 = arith.cmpi ne, %90, %91 : vector<1x256xi32>
    %c0_i32_29 = arith.constant 0 : i32
    %93 = vector.broadcast %c0_i32_29 : i32 to vector<1x256xi32>
    %94 = arith.cmpi slt, %90, %93 : vector<1x256xi32>
    %c0_i32_30 = arith.constant 0 : i32
    %95 = arith.cmpi slt, %88, %c0_i32_30 : i32
    %96 = vector.broadcast %95 : i1 to vector<1x256xi1>
    %97 = vector.broadcast %96 : vector<1x256xi1> to vector<1x256xi1>
    %98 = arith.xori %94, %97 : vector<1x256xi1>
    %99 = arith.andi %98, %92 : vector<1x256xi1>
    %100 = vector.broadcast %88 : i32 to vector<1x256xi32>
    %101 = arith.addi %90, %100 : vector<1x256xi32>
    %102 = arith.select %99, %101, %90 : vector<1x256xi1>, vector<1x256xi32>
    %c0_i32_31 = arith.constant 0 : i32
    %103 = vector.broadcast %c0_i32_31 : i32 to vector<1x256xi32>
    %104 = arith.cmpi sgt, %102, %103 : vector<1x256xi32>
    %c15_i32 = arith.constant 15 : i32
    %105 = vector.broadcast %c15_i32 : i32 to vector<1x256xi32>
    %106 = arith.cmpi slt, %102, %105 : vector<1x256xi32>
    %c16_i32_32 = arith.constant 16 : i32
    %107 = vector.broadcast %c16_i32_32 : i32 to vector<1x256xi32>
    %108 = arith.cmpi sge, %86, %107 : vector<1x256xi32>
    %c240_i32 = arith.constant 240 : i32
    %109 = vector.broadcast %c240_i32 : i32 to vector<1x256xi32>
    %110 = arith.cmpi slt, %86, %109 : vector<1x256xi32>
    %c1_i32_33 = arith.constant 1 : i32
    %111 = tpu.dynamic_rotate %85 by %c1_i32_33 dim 1 : vector<4x256xf32>, i32 -> vector<4x256xf32>
    %cst_34 = arith.constant 0.000000e+00 : f32
    %112 = vector.shape_cast %104 : vector<1x256xi1> to vector<1x256xi1>
    %113 = vector.broadcast %112 : vector<1x256xi1> to vector<4x256xi1>
    %114 = vector.broadcast %cst_34 : f32 to vector<4x256xf32>
    %115 = arith.select %113, %111, %114 : vector<4x256xi1>, vector<4x256xf32>
    %c255_i32 = arith.constant 255 : i32
    %116 = tpu.dynamic_rotate %85 by %c255_i32 dim 1 : vector<4x256xf32>, i32 -> vector<4x256xf32>
    %cst_35 = arith.constant 0.000000e+00 : f32
    %117 = vector.shape_cast %106 : vector<1x256xi1> to vector<1x256xi1>
    %118 = vector.broadcast %117 : vector<1x256xi1> to vector<4x256xi1>
    %119 = vector.broadcast %cst_35 : f32 to vector<4x256xf32>
    %120 = arith.select %118, %116, %119 : vector<4x256xi1>, vector<4x256xf32>
    %cst_36 = arith.constant 0.000000e+00 : f32
    %121 = vector.broadcast %cst_36 : f32 to vector<2x256xf32>
    %cst_37 = arith.constant 0.000000e+00 : f32
    %122 = vector.broadcast %cst_37 : f32 to vector<2x256xf32>
    %c0_38 = arith.constant 0 : index
    %123 = memref.load %arg4[%c0_38] : memref<18xf32, #tpu.memory_space<smem>>
    %124 = vector.extract_strided_slice %115 {offsets = [0, 0], sizes = [2, 256], strides = [1, 1]} : vector<4x256xf32> to vector<2x256xf32>
    %125 = vector.broadcast %123 : f32 to vector<2x256xf32>
    %126 = arith.mulf %125, %124 : vector<2x256xf32>
    %127 = arith.addf %122, %126 : vector<2x256xf32>
    %c9 = arith.constant 9 : index
    %128 = memref.load %arg4[%c9] : memref<18xf32, #tpu.memory_space<smem>>
    %129 = vector.extract_strided_slice %115 {offsets = [2, 0], sizes = [2, 256], strides = [1, 1]} : vector<4x256xf32> to vector<2x256xf32>
    %130 = vector.broadcast %128 : f32 to vector<2x256xf32>
    %131 = arith.mulf %130, %129 : vector<2x256xf32>
    %132 = arith.addf %127, %131 : vector<2x256xf32>
    %c1 = arith.constant 1 : index
    %133 = memref.load %arg4[%c1] : memref<18xf32, #tpu.memory_space<smem>>
    %134 = vector.extract_strided_slice %85 {offsets = [0, 0], sizes = [2, 256], strides = [1, 1]} : vector<4x256xf32> to vector<2x256xf32>
    %135 = vector.broadcast %133 : f32 to vector<2x256xf32>
    %136 = arith.mulf %135, %134 : vector<2x256xf32>
    %137 = arith.addf %132, %136 : vector<2x256xf32>
    %c10 = arith.constant 10 : index
    %138 = memref.load %arg4[%c10] : memref<18xf32, #tpu.memory_space<smem>>
    %139 = vector.extract_strided_slice %85 {offsets = [2, 0], sizes = [2, 256], strides = [1, 1]} : vector<4x256xf32> to vector<2x256xf32>
    %140 = vector.broadcast %138 : f32 to vector<2x256xf32>
    %141 = arith.mulf %140, %139 : vector<2x256xf32>
    %142 = arith.addf %137, %141 : vector<2x256xf32>
    %c2 = arith.constant 2 : index
    %143 = memref.load %arg4[%c2] : memref<18xf32, #tpu.memory_space<smem>>
    %144 = vector.extract_strided_slice %120 {offsets = [0, 0], sizes = [2, 256], strides = [1, 1]} : vector<4x256xf32> to vector<2x256xf32>
    %145 = vector.broadcast %143 : f32 to vector<2x256xf32>
    %146 = arith.mulf %145, %144 : vector<2x256xf32>
    %147 = arith.addf %142, %146 : vector<2x256xf32>
    %c11 = arith.constant 11 : index
    %148 = memref.load %arg4[%c11] : memref<18xf32, #tpu.memory_space<smem>>
    %149 = vector.extract_strided_slice %120 {offsets = [2, 0], sizes = [2, 256], strides = [1, 1]} : vector<4x256xf32> to vector<2x256xf32>
    %150 = vector.broadcast %148 : f32 to vector<2x256xf32>
    %151 = arith.mulf %150, %149 : vector<2x256xf32>
    %152 = arith.addf %147, %151 : vector<2x256xf32>
    %c16_i32_39 = arith.constant 16 : i32
    %153 = tpu.dynamic_rotate %152 by %c16_i32_39 dim 1 : vector<2x256xf32>, i32 -> vector<2x256xf32>
    %cst_40 = arith.constant 0.000000e+00 : f32
    %154 = vector.shape_cast %108 : vector<1x256xi1> to vector<1x256xi1>
    %155 = vector.broadcast %154 : vector<1x256xi1> to vector<2x256xi1>
    %156 = vector.broadcast %cst_40 : f32 to vector<2x256xf32>
    %157 = arith.select %155, %153, %156 : vector<2x256xi1>, vector<2x256xf32>
    %158 = arith.addf %121, %157 : vector<2x256xf32>
    %cst_41 = arith.constant 0.000000e+00 : f32
    %159 = vector.broadcast %cst_41 : f32 to vector<2x256xf32>
    %c3 = arith.constant 3 : index
    %160 = memref.load %arg4[%c3] : memref<18xf32, #tpu.memory_space<smem>>
    %161 = vector.extract_strided_slice %115 {offsets = [0, 0], sizes = [2, 256], strides = [1, 1]} : vector<4x256xf32> to vector<2x256xf32>
    %162 = vector.broadcast %160 : f32 to vector<2x256xf32>
    %163 = arith.mulf %162, %161 : vector<2x256xf32>
    %164 = arith.addf %159, %163 : vector<2x256xf32>
    %c12 = arith.constant 12 : index
    %165 = memref.load %arg4[%c12] : memref<18xf32, #tpu.memory_space<smem>>
    %166 = vector.extract_strided_slice %115 {offsets = [2, 0], sizes = [2, 256], strides = [1, 1]} : vector<4x256xf32> to vector<2x256xf32>
    %167 = vector.broadcast %165 : f32 to vector<2x256xf32>
    %168 = arith.mulf %167, %166 : vector<2x256xf32>
    %169 = arith.addf %164, %168 : vector<2x256xf32>
    %c4 = arith.constant 4 : index
    %170 = memref.load %arg4[%c4] : memref<18xf32, #tpu.memory_space<smem>>
    %171 = vector.extract_strided_slice %85 {offsets = [0, 0], sizes = [2, 256], strides = [1, 1]} : vector<4x256xf32> to vector<2x256xf32>
    %172 = vector.broadcast %170 : f32 to vector<2x256xf32>
    %173 = arith.mulf %172, %171 : vector<2x256xf32>
    %174 = arith.addf %169, %173 : vector<2x256xf32>
    %c13 = arith.constant 13 : index
    %175 = memref.load %arg4[%c13] : memref<18xf32, #tpu.memory_space<smem>>
    %176 = vector.extract_strided_slice %85 {offsets = [2, 0], sizes = [2, 256], strides = [1, 1]} : vector<4x256xf32> to vector<2x256xf32>
    %177 = vector.broadcast %175 : f32 to vector<2x256xf32>
    %178 = arith.mulf %177, %176 : vector<2x256xf32>
    %179 = arith.addf %174, %178 : vector<2x256xf32>
    %c5 = arith.constant 5 : index
    %180 = memref.load %arg4[%c5] : memref<18xf32, #tpu.memory_space<smem>>
    %181 = vector.extract_strided_slice %120 {offsets = [0, 0], sizes = [2, 256], strides = [1, 1]} : vector<4x256xf32> to vector<2x256xf32>
    %182 = vector.broadcast %180 : f32 to vector<2x256xf32>
    %183 = arith.mulf %182, %181 : vector<2x256xf32>
    %184 = arith.addf %179, %183 : vector<2x256xf32>
    %c14 = arith.constant 14 : index
    %185 = memref.load %arg4[%c14] : memref<18xf32, #tpu.memory_space<smem>>
    %186 = vector.extract_strided_slice %120 {offsets = [2, 0], sizes = [2, 256], strides = [1, 1]} : vector<4x256xf32> to vector<2x256xf32>
    %187 = vector.broadcast %185 : f32 to vector<2x256xf32>
    %188 = arith.mulf %187, %186 : vector<2x256xf32>
    %189 = arith.addf %184, %188 : vector<2x256xf32>
    %190 = arith.addf %158, %189 : vector<2x256xf32>
    %cst_42 = arith.constant 0.000000e+00 : f32
    %191 = vector.broadcast %cst_42 : f32 to vector<2x256xf32>
    %c6 = arith.constant 6 : index
    %192 = memref.load %arg4[%c6] : memref<18xf32, #tpu.memory_space<smem>>
    %193 = vector.extract_strided_slice %115 {offsets = [0, 0], sizes = [2, 256], strides = [1, 1]} : vector<4x256xf32> to vector<2x256xf32>
    %194 = vector.broadcast %192 : f32 to vector<2x256xf32>
    %195 = arith.mulf %194, %193 : vector<2x256xf32>
    %196 = arith.addf %191, %195 : vector<2x256xf32>
    %c15 = arith.constant 15 : index
    %197 = memref.load %arg4[%c15] : memref<18xf32, #tpu.memory_space<smem>>
    %198 = vector.extract_strided_slice %115 {offsets = [2, 0], sizes = [2, 256], strides = [1, 1]} : vector<4x256xf32> to vector<2x256xf32>
    %199 = vector.broadcast %197 : f32 to vector<2x256xf32>
    %200 = arith.mulf %199, %198 : vector<2x256xf32>
    %201 = arith.addf %196, %200 : vector<2x256xf32>
    %c7 = arith.constant 7 : index
    %202 = memref.load %arg4[%c7] : memref<18xf32, #tpu.memory_space<smem>>
    %203 = vector.extract_strided_slice %85 {offsets = [0, 0], sizes = [2, 256], strides = [1, 1]} : vector<4x256xf32> to vector<2x256xf32>
    %204 = vector.broadcast %202 : f32 to vector<2x256xf32>
    %205 = arith.mulf %204, %203 : vector<2x256xf32>
    %206 = arith.addf %201, %205 : vector<2x256xf32>
    %c16 = arith.constant 16 : index
    %207 = memref.load %arg4[%c16] : memref<18xf32, #tpu.memory_space<smem>>
    %208 = vector.extract_strided_slice %85 {offsets = [2, 0], sizes = [2, 256], strides = [1, 1]} : vector<4x256xf32> to vector<2x256xf32>
    %209 = vector.broadcast %207 : f32 to vector<2x256xf32>
    %210 = arith.mulf %209, %208 : vector<2x256xf32>
    %211 = arith.addf %206, %210 : vector<2x256xf32>
    %c8 = arith.constant 8 : index
    %212 = memref.load %arg4[%c8] : memref<18xf32, #tpu.memory_space<smem>>
    %213 = vector.extract_strided_slice %120 {offsets = [0, 0], sizes = [2, 256], strides = [1, 1]} : vector<4x256xf32> to vector<2x256xf32>
    %214 = vector.broadcast %212 : f32 to vector<2x256xf32>
    %215 = arith.mulf %214, %213 : vector<2x256xf32>
    %216 = arith.addf %211, %215 : vector<2x256xf32>
    %c17 = arith.constant 17 : index
    %217 = memref.load %arg4[%c17] : memref<18xf32, #tpu.memory_space<smem>>
    %218 = vector.extract_strided_slice %120 {offsets = [2, 0], sizes = [2, 256], strides = [1, 1]} : vector<4x256xf32> to vector<2x256xf32>
    %219 = vector.broadcast %217 : f32 to vector<2x256xf32>
    %220 = arith.mulf %219, %218 : vector<2x256xf32>
    %221 = arith.addf %216, %220 : vector<2x256xf32>
    %c240_i32_43 = arith.constant 240 : i32
    %222 = tpu.dynamic_rotate %221 by %c240_i32_43 dim 1 : vector<2x256xf32>, i32 -> vector<2x256xf32>
    %cst_44 = arith.constant 0.000000e+00 : f32
    %223 = vector.shape_cast %110 : vector<1x256xi1> to vector<1x256xi1>
    %224 = vector.broadcast %223 : vector<1x256xi1> to vector<2x256xi1>
    %225 = vector.broadcast %cst_44 : f32 to vector<2x256xf32>
    %226 = arith.select %224, %222, %225 : vector<2x256xi1>, vector<2x256xf32>
    %227 = arith.addf %190, %226 : vector<2x256xf32>
    %228 = arith.negf %227 : vector<2x256xf32>
    %229 = math.exp %228 : vector<2x256xf32>
    %cst_45 = arith.constant 1.000000e+00 : f32
    %230 = vector.broadcast %cst_45 : f32 to vector<2x256xf32>
    %231 = arith.addf %230, %229 : vector<2x256xf32>
    %232 = arith.divf %230, %231 : vector<2x256xf32>
    %233 = vector.extract_strided_slice %68 {offsets = [0, 0], sizes = [4, 256], strides = [1, 1]} : vector<8x256xf32> to vector<4x256xf32>
    %234 = vector.extract_strided_slice %232 {offsets = [0, 0], sizes = [1, 256], strides = [1, 1]} : vector<2x256xf32> to vector<1x256xf32>
    %235 = vector.broadcast %234 : vector<1x256xf32> to vector<4x256xf32>
    %236 = arith.mulf %233, %235 : vector<4x256xf32>
    %237 = vector.extract_strided_slice %68 {offsets = [4, 0], sizes = [4, 256], strides = [1, 1]} : vector<8x256xf32> to vector<4x256xf32>
    %238 = vector.extract_strided_slice %232 {offsets = [1, 0], sizes = [1, 256], strides = [1, 1]} : vector<2x256xf32> to vector<1x256xf32>
    %239 = vector.broadcast %238 : vector<1x256xf32> to vector<4x256xf32>
    %240 = arith.mulf %237, %239 : vector<4x256xf32>
    %241 = tpu.concatenate %236, %240 in 0 : vector<4x256xf32>, vector<4x256xf32> -> vector<8x256xf32>
    %c0_46 = arith.constant 0 : index
    %c0_47 = arith.constant 0 : index
    %c0_48 = arith.constant 0 : index
    %242 = vector.load %arg5[%c0_46, %c0_47, %c0_48] : memref<1x8x256xf32, #tpu.memory_space<vmem>>, vector<1x8x256xf32>
    %243 = vector.shape_cast %242 : vector<1x8x256xf32> to vector<8x256xf32>
    %244 = vector.shape_cast %241 : vector<8x256xf32> to vector<1x8x256xf32>
    tpu.vector_store %arg5[%c0_46, %c0_47, %c0_48], %244 {strides = array<i32>} : memref<1x8x256xf32, #tpu.memory_space<vmem>>, vector<1x8x256xf32>,
    return
  }
  func.func @transform_0(%arg0: i32) -> (i32, i32, i32) {
    %c0_i32 = arith.constant 0 : i32
    %c0_i32_0 = arith.constant 0 : i32
    %c0_i32_1 = arith.constant 0 : i32
    return %arg0, %c0_i32, %c0_i32_0 : i32, i32, i32
  }
  func.func @transform_1(%arg0: i32) -> (i32, i32) {
    %c0_i32 = arith.constant 0 : i32
    %c0_i32_0 = arith.constant 0 : i32
    %c0_i32_1 = arith.constant 0 : i32
    return %c0_i32, %c0_i32_0 : i32, i32
  }
  func.func @transform_2(%arg0: i32) -> (i32, i32) {
    %c0_i32 = arith.constant 0 : i32
    %c0_i32_0 = arith.constant 0 : i32
    %c0_i32_1 = arith.constant 0 : i32
    return %c0_i32, %c0_i32_0 : i32, i32
  }
  func.func @transform_3(%arg0: i32) -> i32 {
    %c0_i32 = arith.constant 0 : i32
    %c0_i32_0 = arith.constant 0 : i32
    return %c0_i32 : i32
  }
  func.func @transform_4(%arg0: i32) -> (i32, i32, i32) {
    %c0_i32 = arith.constant 0 : i32
    %c0_i32_0 = arith.constant 0 : i32
    %c0_i32_1 = arith.constant 0 : i32
    return %arg0, %c0_i32, %c0_i32_0 : i32, i32, i32
  }
}

</mosaic_0001>

<llo_original>
// kernel: tpu_custom_call.1
$region0: #{tpu_custom_call.1}
  #allocation0 [shape = 'u32[]', space=smem, size = 0x4, offset = 0x4, fixed_abs, tag = 'smem constant byte address 0x4 - core index']
  #allocation1 [shape = 'u32[144,128]{1,0:T(1,128)}', space=vmem, size = 0x12000, scoped, tag = 'internal scratch']
  %s0 = inlined_call_operand.hbm [shape: f32[2,8,256], index: 0, kind: input, shape index: {}]
  %s1 = inlined_call_operand.vmem [shape: f32[4,2], index: 1, kind: input, shape index: {}]
  %s2 = inlined_call_operand.vmem [shape: f32[4,2], index: 2, kind: input, shape index: {}]
  %s3 = inlined_call_operand.vmem [shape: f32[18], index: 3, kind: input, shape index: {}]
  %s4 = inlined_call_operand.hbm [shape: f32[2,8,256], index: 4, kind: output, shape index: {}]
  %s5 = sld [smem:[#allocation0]]
  $region57: #{tpu_custom_call.1} parent=0
    _
  %s7 = ssub.s32 1, %s5
  %s8 = scalar_select 0, %s7, %s5
  $region1: #{tpu_custom_call.1} parent=0
    #allocation2 [shape = 'u8[16384]{0}', space=vmem, size = 0x4000, scoped, tag = 'input window, operand 0']
    #allocation3 [shape = 's32[2]{0}', space=sflag, size = 0x8, scoped, tag = 'scoped memory for tpu_custom_call.1']
    #allocation4 [shape = 's32[2]{0}', space=sflag, size = 0x8, scoped, tag = 'scoped memory for tpu_custom_call.1']
    #allocation5 [shape = 's32[2]{0}', space=sflag, size = 0x8, scoped, tag = 'scoped memory for tpu_custom_call.1']
    #allocation6 [shape = 'u8[512]{0}', space=smem, size = 0x200, scoped, tag = 'input window, operand 3, single buffered']
    #allocation7 [shape = 'u8[16384]{0}', space=vmem, size = 0x4000, scoped, tag = 'output window, operand 0']
    %9 = vsyncpa [#allocation3], 0
    %s10 = scalar_lea.sflag [#allocation3], 1
    %11 = vsyncpa %s10, 0
    %12 = vsyncpa [#allocation5], 0
    %13 = vsyncpa [#allocation4], 0
    %s14 = scalar_lea.sflag [#allocation4], 1
    %15 = vsyncpa %s14, 0
    loop: start=0, step=1, limit=4
    $region2: #{tpu_custom_call.1} parent=1 // loop_pre_header
      _
    $region3: #{tpu_custom_call.1} parent=1 // loop_header
      %s17 = sphi 0, %s21
      %p18 = scmp.ge.s32.totalorder %s17, 4
      %s27 = sphi 0, %s29
      %s30 = sphi 0, %s27
      %s31 = sphi 0, %s30
      %s47 = sphi 0, %s31
      %s51 = sphi 0, %s51
      %s53 = sphi 0, %s51
      %s54 = sphi 0, %s53
      %s68 = sphi 0, %s54
      %s72 = sphi 0, %s72
      %s74 = sphi 0, %s72
      %s75 = sphi 0, %s74
      %s89 = sphi 0, %s75
      %s93 = sphi 0, %s93
      %s95 = sphi 0, %s93
      %s96 = sphi 0, %s95
      %s110 = sphi 0, %s96
      %s116 = sphi 0, %s118
      %s119 = sphi 0, %s116
      %s120 = sphi 0, %s119
      %s136 = sphi 0, %s120
    $region4: #{tpu_custom_call.1} parent=1 // loop_header_branch
      %20 = sbr.rel (%p18) target = $region8
    $region5: #{tpu_custom_call.1} parent=1 // loop_body
      %s22 = ssub.s32 %s17, 1
      %s23 = ssub.s32 %s17, 2
      %s24 = sadd.s32 %s17, 1
      %s25 = ssub.s32 %s17, %s24
      %p26 = scmp.eq.s32.totalorder %s25, 0
      %s28 = sadd.s32 %s27, 1
      %s29 = scalar_select %p26, %s27, %s28
      %p32 = pneg %p26
      %p33 = scmp.eq.s32.totalorder %s17, 1
      %p34 = por %p32, %p33
      %p35 = scmp.ne.s32.totalorder %s27, %s30
      %p36 = scmp.eq.s32.totalorder %s17, 0
      %p37 = por %p35, %p36
      %p38 = scmp.ne.s32.totalorder %s27, %s30
      %p39 = scmp.eq.s32.totalorder %s22, 1
      %p40 = por %p38, %p39
      %p41 = scmp.ne.s32.totalorder %s30, %s31
      %p42 = scmp.eq.s32.totalorder %s22, 0
      %p43 = por %p41, %p42
      %p44 = scmp.ne.s32.totalorder %s30, %s31
      %p45 = scmp.eq.s32.totalorder %s23, 1
      %p46 = por %p44, %p45
      %p48 = scmp.ne.s32.totalorder %s31, %s47
      %p49 = scmp.eq.s32.totalorder %s23, 0
      %p50 = por %p48, %p49
      %s52 = sadd.s32 %s51, 1
      %p55 = scmp.eq.s32.totalorder %s17, 1
      %p56 = scmp.ne.s32.totalorder %s51, %s53
      %p57 = scmp.eq.s32.totalorder %s17, 0
      %p58 = por %p56, %p57
      %p59 = scmp.ne.s32.totalorder %s51, %s53
      %p60 = scmp.eq.s32.totalorder %s22, 1
      %p61 = por %p59, %p60
      %p62 = scmp.ne.s32.totalorder %s53, %s54
      %p63 = scmp.eq.s32.totalorder %s22, 0
      %p64 = por %p62, %p63
      %p65 = scmp.ne.s32.totalorder %s53, %s54
      %p66 = scmp.eq.s32.totalorder %s23, 1
      %p67 = por %p65, %p66
      %p69 = scmp.ne.s32.totalorder %s54, %s68
      %p70 = scmp.eq.s32.totalorder %s23, 0
      %p71 = por %p69, %p70
      %s73 = sadd.s32 %s72, 1
      %p76 = scmp.eq.s32.totalorder %s17, 1
      %p77 = scmp.ne.s32.totalorder %s72, %s74
      %p78 = scmp.eq.s32.totalorder %s17, 0
      %p79 = por %p77, %p78
      %p80 = scmp.ne.s32.totalorder %s72, %s74
      %p81 = scmp.eq.s32.totalorder %s22, 1
      %p82 = por %p80, %p81
      %p83 = scmp.ne.s32.totalorder %s74, %s75
      %p84 = scmp.eq.s32.totalorder %s22, 0
      %p85 = por %p83, %p84
      %p86 = scmp.ne.s32.totalorder %s74, %s75
      %p87 = scmp.eq.s32.totalorder %s23, 1
      %p88 = por %p86, %p87
      %p90 = scmp.ne.s32.totalorder %s75, %s89
      %p91 = scmp.eq.s32.totalorder %s23, 0
      %p92 = por %p90, %p91
      %s94 = sadd.s32 %s93, 1
      %p97 = scmp.eq.s32.totalorder %s17, 1
      %p98 = scmp.ne.s32.totalorder %s93, %s95
      %p99 = scmp.eq.s32.totalorder %s17, 0
      %p100 = por %p98, %p99
      %p101 = scmp.ne.s32.totalorder %s93, %s95
      %p102 = scmp.eq.s32.totalorder %s22, 1
      %p103 = por %p101, %p102
      %p104 = scmp.ne.s32.totalorder %s95, %s96
      %p105 = scmp.eq.s32.totalorder %s22, 0
      %p106 = por %p104, %p105
      %p107 = scmp.ne.s32.totalorder %s95, %s96
      %p108 = scmp.eq.s32.totalorder %s23, 1
      %p109 = por %p107, %p108
      %p111 = scmp.ne.s32.totalorder %s96, %s110
      %p112 = scmp.eq.s32.totalorder %s23, 0
      %p113 = por %p111, %p112
      %s114 = ssub.s32 %s17, %s24
      %p115 = scmp.eq.s32.totalorder %s114, 0
      %s117 = sadd.s32 %s116, 1
      %s118 = scalar_select %p115, %s116, %s117
      %p121 = pneg %p115
      %p122 = scmp.eq.s32.totalorder %s17, 1
      %p123 = por %p121, %p122
      %p124 = scmp.ne.s32.totalorder %s116, %s119
      %p125 = scmp.eq.s32.totalorder %s17, 0
      %p126 = por %p124, %p125
      %p127 = scmp.ne.s32.totalorder %s116, %s119
      %p128 = scmp.eq.s32.totalorder %s22, 1
      %p129 = por %p127, %p128
      %p130 = scmp.ne.s32.totalorder %s119, %s120
      %p131 = scmp.eq.s32.totalorder %s22, 0
      %p132 = por %p130, %p131
      %p133 = scmp.ne.s32.totalorder %s119, %s120
      %p134 = scmp.eq.s32.totalorder %s23, 1
      %p135 = por %p133, %p134
      %p137 = scmp.ne.s32.totalorder %s120, %s136
      %p138 = scmp.eq.s32.totalorder %s23, 0
      %p139 = por %p137, %p138
      %p140 = scmp.le.s32.totalorder 1, %s17
      %p141 = scmp.lt.s32.totalorder %s17, 3
      %p142 = pnand %p140, %p141
      %p143 = pneg %p142
      // Predicated region
      $region9: #{tpu_custom_call.1} parent=5 // pred_check
        _
      $region10: #{tpu_custom_call.1} parent=5 // pred_check_branch
        %145 = sbr.rel (%p142) target = $region12
      $region11: #{tpu_custom_call.1} parent=5 // pred_region
        %s146 = ssub.s32 %s17, 1
        // Predicated region
        $region13: #{tpu_custom_call.1} parent=11 // pred_check
          %p147 = pneg %p64
        $region14: #{tpu_custom_call.1} parent=11 // pred_check_branch
          %149 = sbr.rel (%p147) target = $region16
        $region15: #{tpu_custom_call.1} parent=11 // pred_region
          _
        $region16: #{tpu_custom_call.1} parent=11 // pred_fallthru
          _
        // Predicated region
        $region17: #{tpu_custom_call.1} parent=11 // pred_check
          %p150 = pneg %p85
        $region18: #{tpu_custom_call.1} parent=11 // pred_check_branch
          %152 = sbr.rel (%p150) target = $region20
        $region19: #{tpu_custom_call.1} parent=11 // pred_region
          _
        $region20: #{tpu_custom_call.1} parent=11 // pred_fallthru
          _
        // Predicated region
        $region21: #{tpu_custom_call.1} parent=11 // pred_check
          %p153 = pneg %p106
        $region22: #{tpu_custom_call.1} parent=11 // pred_check_branch
          %155 = sbr.rel (%p153) target = $region24
        $region23: #{tpu_custom_call.1} parent=11 // pred_region
          %s157 = ssub.s32 16, 16
          %158 = vsyncadd [#allocation5], %s157
          %s160 = sshll.u32 %s3, 4
          %s161 = int_to_ptr.vmem [resolvable:$true] %s160
          %163 = dma.vmem_to_smem %s161, 16, [#allocation6], [#allocation5]
        $region24: #{tpu_custom_call.1} parent=11 // pred_fallthru
          _
      $region12: #{tpu_custom_call.1} parent=5 // pred_fallthru
        _
      %p164 = scmp.lt.s32.totalorder %s17, 2
      // Predicated region
      $region25: #{tpu_custom_call.1} parent=5 // pred_check
        %p165 = pneg %p164
      $region26: #{tpu_custom_call.1} parent=5 // pred_check_branch
        %167 = sbr.rel (%p165) target = $region28
      $region27: #{tpu_custom_call.1} parent=5 // pred_region
        // Predicated region
        $region29: #{tpu_custom_call.1} parent=27 // pred_check
          %p168 = pneg %p37
        $region30: #{tpu_custom_call.1} parent=27 // pred_check_branch
          %170 = sbr.rel (%p168) target = $region32
        $region31: #{tpu_custom_call.1} parent=27 // pred_region
          %s171 = sand.u32 %s27, 1
          %s172 = scalar_lea.sflag [#allocation3], %s171
          %s173 = sand.u32 %s27, 1
          %s174 = smul.addr %s173, 16
          %s175 = scalar_lea.vmem [#allocation2], %s174
          %s177 = ssub.s32 256, 256
          %178 = vsyncadd %s172, %s177
          %s179 = smul.addr %s17, 2
          %s180 = smul.addr %s179, 128
          %s181 = scalar_lea.hbm %s0, %s180
          %s183 = sshll.u32 %s175, 4
          %s184 = int_to_ptr.vmem [resolvable:$true] %s183
          %186 = dma.hbm_to_vmem [thread:$0]  %s181, 256, %s184, %s172
        $region32: #{tpu_custom_call.1} parent=27 // pred_fallthru
          _
      $region28: #{tpu_custom_call.1} parent=5 // pred_fallthru
        _
      %p187 = scmp.le.s32.totalorder 1, %s17
      %p188 = scmp.lt.s32.totalorder %s17, 3
      %p189 = pnand %p187, %p188
      %p190 = pneg %p189
      // Predicated region
      $region33: #{tpu_custom_call.1} parent=5 // pred_check
        _
      $region34: #{tpu_custom_call.1} parent=5 // pred_check_branch
        %192 = sbr.rel (%p189) target = $region36
      $region35: #{tpu_custom_call.1} parent=5 // pred_region
        %s193 = ssub.s32 %s17, 1
        %s194 = sand.u32 %s30, 1
        %s195 = scalar_lea.sflag [#allocation3], %s194
        %s196 = sand.u32 %s30, 1
        %s197 = smul.addr %s196, 16
        %s198 = scalar_lea.vmem [#allocation2], %s197
        // Predicated region
        $region37: #{tpu_custom_call.1} parent=35 // pred_check
          %p199 = pneg %p43
        $region38: #{tpu_custom_call.1} parent=35 // pred_check_branch
          %201 = sbr.rel (%p199) target = $region40
        $region39: #{tpu_custom_call.1} parent=35 // pred_region
          %202 = dma.done %s195, 256
        $region40: #{tpu_custom_call.1} parent=35 // pred_fallthru
          _
        // Predicated region
        $region41: #{tpu_custom_call.1} parent=35 // pred_check
          %p203 = pneg %p106
        $region42: #{tpu_custom_call.1} parent=35 // pred_check_branch
          %205 = sbr.rel (%p203) target = $region44
        $region43: #{tpu_custom_call.1} parent=35 // pred_region
          %206 = dma.done [#allocation5], 16
        $region44: #{tpu_custom_call.1} parent=35 // pred_fallthru
          _
        %207 = sfence
        %s208 = sand.u32 %s30, 1
        %s209 = scalar_lea.sflag [#allocation3], %s208
        %s210 = sand.u32 %s30, 1
        %s211 = smul.addr %s210, 16
        %s212 = scalar_lea.vmem [#allocation2], %s211
        %p213 = pneg %p43
        %p214 = pneg %p40
        %p215 = pneg %p64
        %p216 = pneg %p61
        %p217 = pneg %p85
        %p218 = pneg %p82
        %p219 = pneg %p106
        %p220 = pneg %p103
        %p221 = pneg %p132
        %p222 = pneg %p129
        %s223 = sand.u32 %s119, 1
        %s224 = scalar_lea.sflag [#allocation4], %s223
        %s225 = sand.u32 %s119, 1
        %s226 = smul.addr %s225, 16
        %s227 = scalar_lea.vmem [#allocation7], %s226
        %v228 = vld [vmem:[%s198] sm:$0xff]
        %v229 = vld [vmem:[%s198 + $0x8] sm:$0xff]
        %v230 = vld [vmem:[%s1] sm:$0xf]
        %v231 = vld [vmem:[%s2] sm:$0xf]
        %v232 = vmax.f32 %v228, %v229
        %233 = vmax.xlane.f32.xlu0 %v232
        %v234 = vpop.xlane.xlu0 %233
        %v235 = vadd.f32 %v228, %v229
        %236 = vadd.xlane.f32.xlu0 %v235
        %v237 = vpop.xlane.xlu0 %236
        %v238 = vrcp.pop 256.0
        %v239 = vmul.f32 %v237, %v238
        %v240 = vmul.f32 %v230, %v234
        %vm241 = vcmask 11264
        %v242 = vsel %vm241, %v240, 0.0
        %v243 = vrot.slane %v242, 4
        %v244 = vadd.f32 %v242, %v243
        %v245 = vrot.slane %v244, 2
        %v246 = vadd.f32 %v244, %v245
        %v247 = vrot.slane %v246, 1
        %v248 = vadd.f32 %v246, %v247
        %v249 = vmax.f32 %v248, 0.0
        %v250 = vmul.f32 %v230, %v239
        %v251 = vsel %vm241, %v250, 0.0
        %v252 = vrot.slane %v251, 4
        %v253 = vadd.f32 %v251, %v252
        %v254 = vrot.slane %v253, 2
        %v255 = vadd.f32 %v253, %v254
        %v256 = vrot.slane %v255, 1
        %v257 = vadd.f32 %v255, %v256
        %v258 = vmax.f32 %v257, 0.0
        %v259 = vmul.f32 %v231, %v249
        %v260 = vsel %vm241, %v259, 0.0
        %261 = vadd.xlane.f32.xlu0 %v260
        %v262 = vpop.xlane.xlu0 %261
        %v263 = vmul.f32 %v231, %v258
        %v264 = vsel %vm241, %v263, 0.0
        %265 = vadd.xlane.f32.xlu0 %v264
        %v266 = vpop.xlane.xlu0 %265
        %v267 = vadd.f32 %v262, %v266
        %v268 = vxor.u32 %v267, 2147483648
        %v269 = vmul.f32 %v268, 1.442695
        %v270 = vpow.pop %v269
        %v271 = vadd.f32 %v270, 1.0
        %v272 = vrcp.pop %v271
        %v273 = vmul.f32 1.0, %v272
        %v275 = vrot.slane %v234, 4
        %v277 = vmul.f32 %v230, %v275
        %v278 = vsel %vm241, %v277, 0.0
        %v279 = vrot.slane %v278, 4
        %v280 = vadd.f32 %v278, %v279
        %v281 = vrot.slane %v280, 2
        %v282 = vadd.f32 %v280, %v281
        %v283 = vrot.slane %v282, 1
        %v284 = vadd.f32 %v282, %v283
        %v285 = vmax.f32 %v284, 0.0
        %v287 = vrot.slane %v239, 4
        %v289 = vmul.f32 %v230, %v287
        %v290 = vsel %vm241, %v289, 0.0
        %v291 = vrot.slane %v290, 4
        %v292 = vadd.f32 %v290, %v291
        %v293 = vrot.slane %v292, 2
        %v294 = vadd.f32 %v292, %v293
        %v295 = vrot.slane %v294, 1
        %v296 = vadd.f32 %v294, %v295
        %v297 = vmax.f32 %v296, 0.0
        %v298 = vmul.f32 %v231, %v285
        %v299 = vsel %vm241, %v298, 0.0
        %300 = vadd.xlane.f32.xlu0 %v299
        %v301 = vpop.xlane.xlu0 %300
        %v302 = vmul.f32 %v231, %v297
        %v303 = vsel %vm241, %v302, 0.0
        %304 = vadd.xlane.f32.xlu0 %v303
        %v305 = vpop.xlane.xlu0 %304
        %v306 = vadd.f32 %v301, %v305
        %v307 = vxor.u32 %v306, 2147483648
        %v308 = vmul.f32 %v307, 1.442695
        %v309 = vpow.pop %v308
        %v310 = vadd.f32 %v309, 1.0
        %v311 = vrcp.pop %v310
        %v312 = vmul.f32 1.0, %v311
        %v314 = vrot.slane %v312, 4
        %vm316 = vcmask 1043456
        %v317 = vsel %vm316, %v273, %v314
        %319 = vset.pattern.permute.xlu0 0
        %320 = vperm.xlu0 %319, %v317
        %v321 = vpop.permute.xlu0 %320
        %v323 = vmul.f32 %v228, %v321
        %v324 = vmul.f32 %v229, %v321
        %v325 = vsel %vm316, %v323, -inf
        %v326 = vrot.slane %v325, 4
        %v327 = vmax.f32 %v325, %v326
        %v328 = vrot.slane %v327, 2
        %v329 = vmax.f32 %v327, %v328
        %v330 = vrot.slane %v329, 1
        %v331 = vmax.f32 %v329, %v330
        %v332 = vsel %vm316, %v324, -inf
        %v333 = vrot.slane %v332, 4
        %v334 = vmax.f32 %v332, %v333
        %v335 = vrot.slane %v334, 2
        %v336 = vmax.f32 %v334, %v335
        %v337 = vrot.slane %v336, 1
        %v338 = vmax.f32 %v336, %v337
        %vm339 = vcmask 1047556
        %v340 = vsel %vm339, %v323, -inf
        %v341 = vrot.slane %v340, 4
        %v342 = vmax.f32 %v340, %v341
        %v343 = vrot.slane %v342, 2
        %v344 = vmax.f32 %v342, %v343
        %v345 = vrot.slane %v344, 1
        %v346 = vmax.f32 %v344, %v345
        %v347 = vsel %vm339, %v324, -inf
        %v348 = vrot.slane %v347, 4
        %v349 = vmax.f32 %v347, %v348
        %v350 = vrot.slane %v349, 2
        %v351 = vmax.f32 %v349, %v350
        %v352 = vrot.slane %v351, 1
        %v353 = vmax.f32 %v351, %v352
        %v354 = vsel %vm316, %v323, 0.0
        %v355 = vrot.slane %v354, 4
        %v356 = vadd.f32 %v354, %v355
        %v357 = vrot.slane %v356, 2
        %v358 = vadd.f32 %v356, %v357
        %v359 = vrot.slane %v358, 1
        %v360 = vadd.f32 %v358, %v359
        %v361 = vsel %vm316, %v324, 0.0
        %v362 = vrot.slane %v361, 4
        %v363 = vadd.f32 %v361, %v362
        %v364 = vrot.slane %v363, 2
        %v365 = vadd.f32 %v363, %v364
        %v366 = vrot.slane %v365, 1
        %v367 = vadd.f32 %v365, %v366
        %v368 = vrcp.pop 4.0
        %v369 = vmul.f32 %v360, %v368
        %v370 = vmul.f32 %v367, %v368
        %v373 = vrot.slane %v323, 4
        %v374 = vrot.slane %v324, 4
        %v377 = vsel %vm316, %v373, 0.0
        %v378 = vrot.slane %v377, 4
        %v379 = vadd.f32 %v377, %v378
        %v380 = vrot.slane %v379, 2
        %v381 = vadd.f32 %v379, %v380
        %v382 = vrot.slane %v381, 1
        %v383 = vadd.f32 %v381, %v382
        %v384 = vsel %vm316, %v374, 0.0
        %v385 = vrot.slane %v384, 4
        %v386 = vadd.f32 %v384, %v385
        %v387 = vrot.slane %v386, 2
        %v388 = vadd.f32 %v386, %v387
        %v389 = vrot.slane %v388, 1
        %v390 = vadd.f32 %v388, %v389
        %v391 = vmul.f32 %v383, %v368
        %v392 = vmul.f32 %v390, %v368
        %vm393 = vcmask 1040384
        %v394 = vsel %vm393, %v331, %v346
        %v395 = vsel %vm393, %v338, %v353
        %vm396 = vcmask 1041408
        %v397 = vsel %vm396, %v394, %v369
        %v398 = vsel %vm396, %v395, %v370
        %vm399 = vcmask 1042432
        %v400 = vsel %vm399, %v397, %v391
        %v401 = vsel %vm399, %v398, %v392
        %v402 = vlaneseq
        %v403 = vand.u32 %v402, 127
        %v404 = vadd.s32 %v403, 128
        %vm405 = vcmp.lt.s32.totalorder %v403, 0
        %v406 = vsub.s32 0, %v403
        %v407 = vsel %vm405, %v406, %v403
        %v408 = vshrl.u32 %v407, 4
        %v409 = vand.u32 %v407, 15
        %v410 = vsub.s32 0, %v409
        %v411 = vsel %vm405, %v410, %v409
        %vm412 = vcmp.lt.s32.totalorder %v404, 0
        %v413 = vsub.s32 0, %v404
        %v414 = vsel %vm412, %v413, %v404
        %v415 = vshrl.u32 %v414, 4
        %v416 = vand.u32 %v414, 15
        %v417 = vsub.s32 0, %v416
        %v418 = vsel %vm412, %v417, %v416
        %vm419 = vcmp.ne.s32.totalorder %v411, 0
        %vm420 = vcmp.ne.s32.totalorder %v418, 0
        %vm421 = vcmp.lt.s32.totalorder %v411, 0
        %vm422 = vcmp.lt.s32.totalorder %v418, 0
        %vm423 = vmand %vm421, %vm419
        %vm424 = vmand %vm422, %vm420
        %v425 = vadd.s32 %v411, 16
        %v426 = vadd.s32 %v418, 16
        %v427 = vsel %vm423, %v425, %v411
        %v428 = vsel %vm424, %v426, %v418
        %vm429 = vcmp.gt.s32.totalorder %v427, 0
        %vm430 = vcmp.gt.s32.totalorder %v428, 0
        %vm431 = vcmp.lt.s32.totalorder %v427, 15
        %vm432 = vcmp.lt.s32.totalorder %v428, 15
        %vm433 = vcmp.ge.s32.totalorder %v403, 16
        %vm434 = vcmp.ge.s32.totalorder %v404, 16
        %vm435 = vcmp.lt.s32.totalorder %v403, 240
        %vm436 = vcmp.lt.s32.totalorder %v404, 240
        %437 = vrot.lane.b32.xlu0 %v400, 1
        %v438 = vpop.permute.xlu0 %437
        %439 = vrot.lane.b32.xlu0 %v401, 1
        %v440 = vpop.permute.xlu0 %439
        %vm441 = vcmp.lt.s32.totalorder %v403, 1
        %v442 = vsel %vm441, %v438, %v440
        %v443 = vsel %vm441, %v440, %v438
        %v444 = vsel %vm429, 1, 0
        %v445 = vsel %vm430, 1, 0
        %vm446 = vcmp.eq.s32.totalorder %v444, 1
        %vm447 = vcmp.eq.s32.totalorder %v445, 1
        %v448 = vsel %vm446, %v443, 0.0
        %v449 = vsel %vm447, %v442, 0.0
        %450 = vrot.lane.b32.xlu0 %v400, 127
        %v451 = vpop.permute.xlu0 %450
        %452 = vrot.lane.b32.xlu0 %v401, 127
        %v453 = vpop.permute.xlu0 %452
        %vm454 = vcmp.lt.s32.totalorder %v403, 127
        %v455 = vsel %vm454, %v451, %v453
        %v456 = vsel %vm454, %v453, %v451
        %v457 = vsel %vm431, 1, 0
        %v458 = vsel %vm432, 1, 0
        %vm459 = vcmp.eq.s32.totalorder %v457, 1
        %vm460 = vcmp.eq.s32.totalorder %v458, 1
        %v461 = vsel %vm459, %v455, 0.0
        %v462 = vsel %vm460, %v456, 0.0
        %s463 = sld [smem:[#allocation6]]
        %v464 = vstv %s463
        %v465 = vmul.f32 %v464, %v448
        %v466 = vmul.f32 %v464, %v449
        %v467 = vadd.f32 %v465, 0.0
        %v468 = vadd.f32 %v466, 0.0
        %s469 = sld [smem:[#allocation6 + $0x9]]
        %v470 = vstv %s469
        %v471 = vmul.f32 %v470, %v448
        %v472 = vmul.f32 %v470, %v449
        %v475 = vrot.slane %v471, 2
        %v476 = vrot.slane %v472, 2
        %v479 = vadd.f32 %v467, %v475
        %v480 = vadd.f32 %v468, %v476
        %s481 = sld [smem:[#allocation6 + $0x1]]
        %v482 = vstv %s481
        %v483 = vmul.f32 %v482, %v400
        %v484 = vmul.f32 %v482, %v401
        %v485 = vadd.f32 %v479, %v483
        %v486 = vadd.f32 %v480, %v484
        %s487 = sld [smem:[#allocation6 + $0xa]]
        %v488 = vstv %s487
        %v489 = vmul.f32 %v488, %v400
        %v490 = vmul.f32 %v488, %v401
        %v493 = vrot.slane %v489, 2
        %v494 = vrot.slane %v490, 2
        %v497 = vadd.f32 %v485, %v493
        %v498 = vadd.f32 %v486, %v494
        %s499 = sld [smem:[#allocation6 + $0x2]]
        %v500 = vstv %s499
        %v501 = vmul.f32 %v500, %v461
        %v502 = vmul.f32 %v500, %v462
        %v503 = vadd.f32 %v497, %v501
        %v504 = vadd.f32 %v498, %v502
        %s505 = sld [smem:[#allocation6 + $0xb]]
        %v506 = vstv %s505
        %v507 = vmul.f32 %v506, %v461
        %v508 = vmul.f32 %v506, %v462
        %v511 = vrot.slane %v507, 2
        %v512 = vrot.slane %v508, 2
        %v515 = vadd.f32 %v503, %v511
        %v516 = vadd.f32 %v504, %v512
        %517 = vrot.lane.b32.xlu0 %v515, 16
        %v518 = vpop.permute.xlu0 %517
        %519 = vrot.lane.b32.xlu0 %v516, 16
        %v520 = vpop.permute.xlu0 %519
        %vm521 = vcmp.lt.s32.totalorder %v403, 16
        %v522 = vsel %vm521, %v518, %v520
        %v523 = vsel %vm521, %v520, %v518
        %v524 = vsel %vm433, 1, 0
        %v525 = vsel %vm434, 1, 0
        %vm526 = vcmp.eq.s32.totalorder %v524, 1
        %vm527 = vcmp.eq.s32.totalorder %v525, 1
        %v528 = vsel %vm526, %v523, 0.0
        %v529 = vsel %vm527, %v522, 0.0
        %v530 = vadd.f32 %v528, 0.0
        %v531 = vadd.f32 %v529, 0.0
        %s532 = sld [smem:[#allocation6 + $0x3]]
        %v533 = vstv %s532
        %v534 = vmul.f32 %v533, %v448
        %v535 = vmul.f32 %v533, %v449
        %v536 = vadd.f32 %v534, 0.0
        %v537 = vadd.f32 %v535, 0.0
        %s538 = sld [smem:[#allocation6 + $0xc]]
        %v539 = vstv %s538
        %v540 = vmul.f32 %v539, %v448
        %v541 = vmul.f32 %v539, %v449
        %v544 = vrot.slane %v540, 2
        %v545 = vrot.slane %v541, 2
        %v548 = vadd.f32 %v536, %v544
        %v549 = vadd.f32 %v537, %v545
        %s550 = sld [smem:[#allocation6 + $0x4]]
        %v551 = vstv %s550
        %v552 = vmul.f32 %v551, %v400
        %v553 = vmul.f32 %v551, %v401
        %v554 = vadd.f32 %v548, %v552
        %v555 = vadd.f32 %v549, %v553
        %s556 = sld [smem:[#allocation6 + $0xd]]
        %v557 = vstv %s556
        %v558 = vmul.f32 %v557, %v400
        %v559 = vmul.f32 %v557, %v401
        %v562 = vrot.slane %v558, 2
        %v563 = vrot.slane %v559, 2
        %v566 = vadd.f32 %v554, %v562
        %v567 = vadd.f32 %v555, %v563
        %s568 = sld [smem:[#allocation6 + $0x5]]
        %v569 = vstv %s568
        %v570 = vmul.f32 %v569, %v461
        %v571 = vmul.f32 %v569, %v462
        %v572 = vadd.f32 %v566, %v570
        %v573 = vadd.f32 %v567, %v571
        %s574 = sld [smem:[#allocation6 + $0xe]]
        %v575 = vstv %s574
        %v576 = vmul.f32 %v575, %v461
        %v577 = vmul.f32 %v575, %v462
        %v580 = vrot.slane %v576, 2
        %v581 = vrot.slane %v577, 2
        %v584 = vadd.f32 %v572, %v580
        %v585 = vadd.f32 %v573, %v581
        %v586 = vadd.f32 %v530, %v584
        %v587 = vadd.f32 %v531, %v585
        %s588 = sld [smem:[#allocation6 + $0x6]]
        %v589 = vstv %s588
        %v590 = vmul.f32 %v589, %v448
        %v591 = vmul.f32 %v589, %v449
        %v592 = vadd.f32 %v590, 0.0
        %v593 = vadd.f32 %v591, 0.0
        %s594 = sld [smem:[#allocation6 + $0xf]]
        %v595 = vstv %s594
        %v596 = vmul.f32 %v595, %v448
        %v597 = vmul.f32 %v595, %v449
        %v600 = vrot.slane %v596, 2
        %v601 = vrot.slane %v597, 2
        %v604 = vadd.f32 %v592, %v600
        %v605 = vadd.f32 %v593, %v601
        %s606 = sld [smem:[#allocation6 + $0x7]]
        %v607 = vstv %s606
        %v608 = vmul.f32 %v607, %v400
        %v609 = vmul.f32 %v607, %v401
        %v610 = vadd.f32 %v604, %v608
        %v611 = vadd.f32 %v605, %v609
        %s612 = sld [smem:[#allocation6 + $0x10]]
        %v613 = vstv %s612
        %v614 = vmul.f32 %v613, %v400
        %v615 = vmul.f32 %v613, %v401
        %v618 = vrot.slane %v614, 2
        %v619 = vrot.slane %v615, 2
        %v622 = vadd.f32 %v610, %v618
        %v623 = vadd.f32 %v611, %v619
        %s624 = sld [smem:[#allocation6 + $0x8]]
        %v625 = vstv %s624
        %v626 = vmul.f32 %v625, %v461
        %v627 = vmul.f32 %v625, %v462
        %v628 = vadd.f32 %v622, %v626
        %v629 = vadd.f32 %v623, %v627
        %s630 = sld [smem:[#allocation6 + $0x11]]
        %v631 = vstv %s630
        %v632 = vmul.f32 %v631, %v461
        %v633 = vmul.f32 %v631, %v462
        %v636 = vrot.slane %v632, 2
        %v637 = vrot.slane %v633, 2
        %v640 = vadd.f32 %v628, %v636
        %v641 = vadd.f32 %v629, %v637
        %642 = vrot.lane.b32.xlu0 %v640, 112
        %v643 = vpop.permute.xlu0 %642
        %644 = vrot.lane.b32.xlu0 %v641, 112
        %v645 = vpop.permute.xlu0 %644
        %vm646 = vcmp.lt.s32.totalorder %v403, 112
        %v647 = vsel %vm646, %v643, %v645
        %v648 = vsel %vm646, %v645, %v643
        %v649 = vsel %vm435, 1, 0
        %v650 = vsel %vm436, 1, 0
        %vm651 = vcmp.eq.s32.totalorder %v649, 1
        %vm652 = vcmp.eq.s32.totalorder %v650, 1
        %v653 = vsel %vm651, %v647, 0.0
        %v654 = vsel %vm652, %v648, 0.0
        %v655 = vadd.f32 %v586, %v653
        %v656 = vadd.f32 %v587, %v654
        %v657 = vxor.u32 %v655, 2147483648
        %v658 = vxor.u32 %v656, 2147483648
        %v659 = vmul.f32 %v657, 1.442695
        %v660 = vpow.pop %v659
        %v661 = vmul.f32 %v658, 1.442695
        %v662 = vpow.pop %v661
        %v663 = vadd.f32 %v660, 1.0
        %v664 = vadd.f32 %v662, 1.0
        %v665 = vrcp.pop %v663
        %v666 = vmul.f32 1.0, %v665
        %v667 = vrcp.pop %v664
        %v668 = vmul.f32 1.0, %v667
        %v669 = vlaneseq
        %v670 = vshrl.u32 %v669, 7
        %v671 = vsub.s32 0, %v670
        %v672 = vrot.slane %v666, %v671
        %v673 = vlaneseq
        %v674 = vshrl.u32 %v673, 7
        %v675 = vsub.s32 0, %v674
        %v676 = vrot.slane %v668, %v675
        %v677 = vmul.f32 %v323, %v672
        %v678 = vmul.f32 %v324, %v676
        %v679 = vlaneseq
        %v680 = vshrl.u32 %v679, 7
        %v681 = vsub.s32 1, %v680
        %v682 = vrot.slane %v666, %v681
        %v683 = vlaneseq
        %v684 = vshrl.u32 %v683, 7
        %v685 = vsub.s32 1, %v684
        %v686 = vrot.slane %v668, %v685
        %v687 = vmul.f32 %v323, %v682
        %v688 = vmul.f32 %v324, %v686
        %v689 = vsel %vm316, %v677, %v687
        %v690 = vsel %vm316, %v678, %v688
        %691 = vst [vmem:[%s227] sm:$0xff] %v689
        %692 = vst [vmem:[%s227 + $0x8] sm:$0xff] %v690
        %s693 = sand.u32 %s119, 1
        %s694 = scalar_lea.sflag [#allocation4], %s693
        %s695 = sand.u32 %s119, 1
        %s696 = smul.addr %s695, 16
        %s697 = scalar_lea.vmem [#allocation7], %s696
        // Predicated region
        $region45: #{tpu_custom_call.1} parent=35 // pred_check
          %p698 = pneg %p129
        $region46: #{tpu_custom_call.1} parent=35 // pred_check_branch
          %700 = sbr.rel (%p698) target = $region48
        $region47: #{tpu_custom_call.1} parent=35 // pred_region
          %s702 = ssub.s32 256, 256
          %703 = vsyncadd %s694, %s702
          %s704 = smul.addr %s22, 2
          %s705 = smul.addr %s704, 128
          %s706 = scalar_lea.hbm %s4, %s705
          %s708 = sshll.u32 %s697, 4
          %s709 = int_to_ptr.vmem [resolvable:$true] %s708
          %711 = dma.vmem_to_hbm [thread:$0]  %s709, 256, %s706, %s694
        $region48: #{tpu_custom_call.1} parent=35 // pred_fallthru
          _
      $region36: #{tpu_custom_call.1} parent=5 // pred_fallthru
        _
      %p712 = scmp.le.s32.totalorder 2, %s17
      // Predicated region
      $region49: #{tpu_custom_call.1} parent=5 // pred_check
        %p713 = pneg %p712
      $region50: #{tpu_custom_call.1} parent=5 // pred_check_branch
        %715 = sbr.rel (%p713) target = $region52
      $region51: #{tpu_custom_call.1} parent=5 // pred_region
        %s716 = ssub.s32 %s17, 2
        // Predicated region
        $region53: #{tpu_custom_call.1} parent=51 // pred_check
          %p717 = pneg %p135
        $region54: #{tpu_custom_call.1} parent=51 // pred_check_branch
          %719 = sbr.rel (%p717) target = $region56
        $region55: #{tpu_custom_call.1} parent=51 // pred_region
          %s720 = sand.u32 %s120, 1
          %s721 = scalar_lea.sflag [#allocation4], %s720
          %s722 = sand.u32 %s120, 1
          %s723 = smul.addr %s722, 16
          %s724 = scalar_lea.vmem [#allocation7], %s723
          %725 = dma.done %s721, 256
        $region56: #{tpu_custom_call.1} parent=51 // pred_fallthru
          _
      $region52: #{tpu_custom_call.1} parent=5 // pred_fallthru
        _
    $region6: #{tpu_custom_call.1} parent=1 // loop_footer
      %s21 = sadd.s32 1, %s17
    $region7: #{tpu_custom_call.1} parent=1 // loop_footer_branch
      %16 = sbr.rel target = $region3
    $region8: #{tpu_custom_call.1} parent=1 // loop_exit
      _
    %726 = vsyncpa [#allocation3], 1
    %s727 = scalar_lea.sflag [#allocation3], 1
    %728 = vsyncpa %s727, 1
    %729 = vsyncpa [#allocation4], 1
    %s730 = scalar_lea.sflag [#allocation4], 1
    %731 = vsyncpa %s730, 1
    %732 = vsyncpa [#allocation5], 1
    %s733 = scalar_lea.sflag [#allocation5], 1
    %734 = vsyncpa %s733, 1

</llo_original>
